<compile_context>
chip_gen: v6e
topology: v6e:2x2x1
jax: 0.10.0
libtpu: 0.0.40
codegen_flags: <defaults>
</compile_context>

<pallas_src>
import functools

import jax
import jax.numpy as jnp
from jax import lax
from jax.experimental import pallas as pl
from jax.experimental.pallas import tpu as pltpu


def _round_up(x, m):
    return (x + m - 1) // m * m


def _self_attention_kernel(x_j_ref, x_i_ref, w_hf_ref, b_hf_ref,
                           w_g_ref, b_g_ref, gamma_ref, o_ref,
                           g_scr, m_scr, l_scr, acc_scr, hf_scr,
                           *, n_channels, tile, n_valid, n_pad,
                           cache_hf, compute_dtype):
    j = pl.program_id(1)
    i = pl.program_id(2)
    n_i = pl.num_programs(2)

    x_j = x_j_ref[0]                                   # (Cp, Tj) output-column tile
    x_i = x_i_ref[0]                                   # (Cp, Ti) reduction-row tile

    # ---- per-(b, j) init: running-softmax state + cached g_j projection ----
    @pl.when(i == 0)
    def _init():
        m_scr[...] = jnp.full(m_scr.shape, -jnp.inf, dtype=m_scr.dtype)
        l_scr[...] = jnp.zeros(l_scr.shape, dtype=l_scr.dtype)
        acc_scr[...] = jnp.zeros(acc_scr.shape, dtype=acc_scr.dtype)
        # g only depends on the j tile -> compute once per j sweep.
        g_scr[...] = (jnp.dot(w_g_ref[...], x_j.astype(compute_dtype),
                              preferred_element_type=jnp.float32)
                      + b_g_ref[...]).astype(g_scr.dtype)

    def _project_hf():
        # Fused h/f projection: one MXU pass, bias add in f32.
        return (jnp.dot(w_hf_ref[...], x_i.astype(compute_dtype),
                        preferred_element_type=jnp.float32)
                + b_hf_ref[...])                       # (Cp + Clp, Ti) f32

    if cache_hf:
        # Review item 1: project each i tile only during the first j sweep,
        # cache in VMEM, and reuse it for every later j tile of this batch.
        # (The x_i block is still streamed by the pipeline for j > 0; raising
        #  the tile to 256 halves that residual HBM re-read.)
        @pl.when(j == 0)
        def _fill_cache():
            hf_scr[i] = _project_hf().astype(hf_scr.dtype)

        hf = hf_scr[i]                                 # (Cp + Clp, Ti)
    else:
        hf = _project_hf().astype(compute_dtype)

    h_i = hf[:n_channels, :]                           # (Cp,  Ti)
    f_i = hf[n_channels:, :]                           # (Clp, Ti)
    g_j = g_scr[...]                                   # (Clp, Tj)

    # ---- scores s[i, j] = f[:, i] . g[:, j]: contract the Clp axes directly.
    # TODO(synk): review item 9 -- confirm via pl.lower_as_mlir that this
    # transposed-LHS contraction lowers without a per-step vxpose; the operand
    # is only (C/factor, Ti) so any relayout is minor next to the matmuls.
    s = lax.dot_general(f_i, g_j, (((0,), (0,)), ((), ())),
                        preferred_element_type=jnp.float32)   # (Ti, Tj) f32

    if n_pad != n_valid:
        # Spatial padding (review item 10): padded i rows get zero softmax mass.
        row_ids = i * tile + lax.broadcasted_iota(jnp.int32, s.shape, 0)
        s = jnp.where(row_ids < n_valid, s, jnp.float32(-1e30))

    # ---- online softmax over the i axis (torch softmax dim=-2); state is
    #      kept per output column j, all in f32 (v5e-safe). ----
    m_prev = m_scr[...]                                # (1, Tj)
    m_new = jnp.maximum(m_prev, jnp.max(s, axis=0, keepdims=True))
    alpha = jnp.exp(m_prev - m_new)                    # (1, Tj)
    p = jnp.exp(s - m_new)                             # (Ti, Tj) f32
    l_scr[...] = alpha * l_scr[...] + jnp.sum(p, axis=0, keepdims=True)
    acc_scr[...] = alpha * acc_scr[...] + jnp.dot(
        h_i.astype(compute_dtype), p.astype(compute_dtype),
        preferred_element_type=jnp.float32)            # (Cp, Tj)
    m_scr[...] = m_new

    # ---- epilogue (once per (b, j)): normalize, gamma-scale, residual add ----
    @pl.when(i == n_i - 1)
    def _finalize():
        l = l_scr[...]
        r = pl.reciprocal(l, approx=True)              # EUP vrcp (free slot)
        inv_l = r * (2.0 - l * r)                      # Newton step -> f32 accuracy
        gamma = gamma_ref[0]                           # scalar from SMEM
        o_ref[0] = gamma * (acc_scr[...] * inv_l) + x_j


def _vmem_budget_bytes():
    """Generation-aware VMEM budget (review item 7)."""
    kind = ""
    try:
        kind = jax.devices()[0].device_kind.lower()
    except Exception:
        pass
    if "v7" in kind:                       # v7x: 64 MiB physical per TensorCore
        return 48 * 1024 * 1024
    return 100 * 1024 * 1024               # v5e / v6e: 128 MiB physical


def self_attention_pallas(x_nchw, params, gamma, *, tile=None,
                          use_bf16=False, cache_hf=None):
    """SAGAN self-attention forward (scaling == 1). x_nchw: (B, C, H, W) f32."""
    b, c, hh, ww = x_nchw.shape
    n = hh * ww
    wf, bf_, wg, bg, wh, bh = params                   # PyTorch (C_out, C_in) 1x1 convs
    c_low = wf.shape[0]

    compute_dtype = jnp.bfloat16 if use_bf16 else jnp.float32
    w_isize = 2 if use_bf16 else 4

    # Lane-dense spatial tiles; pad N to a multiple of the tile (review 10) and
    # pad the channel dims to sublane multiples so slices are zero-cost views.
    if tile is None:
        tile = 256 if n >= 256 else 128    # 256 feeds the 2x256^2 MXU (v6e/v7x)
    assert tile % 128 == 0, "spatial tile must be a multiple of 128"
    n_pad = _round_up(n, tile)
    n_tiles = n_pad // tile
    c_p = _round_up(c, 8)
    c_low_p = _round_up(c_low, 8)

    # VMEM budgeting: decide whether the hf cache fits and pick the vmem limit.
    budget = _vmem_budget_bytes()
    x_tile_b = c_p * tile * 4
    weights_b = ((c_p + c_low_p) * c_p + c_low_p * c_p) * w_isize \
        + (c_p + 2 * c_low_p) * 4
    pipeline_b = 2 * (3 * x_tile_b + weights_b)        # double-buffered blocks
    scratch_b = c_low_p * tile * w_isize + 2 * tile * 4 + c_p * tile * 4
    hf_cache_b = n_tiles * (c_p + c_low_p) * tile * w_isize
    if cache_hf is None:
        cache_hf = pipeline_b + scratch_b + hf_cache_b + (4 << 20) <= budget
    need = pipeline_b + scratch_b + (hf_cache_b if cache_hf else 0)
    vmem_limit = int(min(budget, max(32 << 20, need + (8 << 20))))

    # Channels-first flatten (pure reshape) + zero padding; padded rows/cols
    # carry zero weights/biases so they contribute nothing to the softmax.
    x_flat = jnp.pad(x_nchw.reshape(b, c, n),
                     ((0, 0), (0, c_p - c), (0, n_pad - n)))

    def pad2(w, rows, cols):
        return jnp.pad(w, ((0, rows - w.shape[0]), (0, cols - w.shape[1])))

    # Fuse h/f into one (Cp+Clp, Cp) projection; h first so the split boundary
    # sits on a sublane-tile boundary.
    w_hf = jnp.concatenate([pad2(wh, c_p, c_p), pad2(wf, c_low_p, c_p)],
                           axis=0).astype(compute_dtype)
    w_g = pad2(wg, c_low_p, c_p).astype(compute_dtype)
    b_hf = jnp.concatenate([jnp.pad(bh, (0, c_p - c)),
                            jnp.pad(bf_, (0, c_low_p - c_low))]).reshape(-1, 1)
    b_g = jnp.pad(bg, (0, c_low_p - c_low)).reshape(c_low_p, 1)
    gamma_s = jnp.asarray(gamma, jnp.float32).reshape(1)

    kernel = functools.partial(
        _self_attention_kernel, n_channels=c_p, tile=tile, n_valid=n,
        n_pad=n_pad, cache_hf=cache_hf, compute_dtype=compute_dtype)
    const = lambda b_, j, i: (0, 0)

    hf_cache_shape = (n_tiles, c_p + c_low_p, tile) if cache_hf else (1, 8, 128)

    grid_spec = pltpu.PrefetchScalarGridSpec(
        num_scalar_prefetch=0,
        grid=(b, n_tiles, n_tiles),                    # (batch, j tiles, i tiles)
        in_specs=[
            pl.BlockSpec((1, c_p, tile), lambda b_, j, i: (b_, 0, j)),   # x j-tile
            pl.BlockSpec((1, c_p, tile), lambda b_, j, i: (b_, 0, i)),   # x i-tile
            pl.BlockSpec((c_p + c_low_p, c_p), const),                   # W_hf
            pl.BlockSpec((c_p + c_low_p, 1), const),                     # b_hf
            pl.BlockSpec((c_low_p, c_p), const),                         # W_g
            pl.BlockSpec((c_low_p, 1), const),                           # b_g
            pl.BlockSpec(memory_space=pltpu.MemorySpace.SMEM),           # gamma
        ],
        out_specs=pl.BlockSpec((1, c_p, tile), lambda b_, j, i: (b_, 0, j)),
        scratch_shapes=[
            pltpu.VMEM((c_low_p, tile), compute_dtype),   # cached g_j
            pltpu.VMEM((1, tile), jnp.float32),           # running max  m[j]
            pltpu.VMEM((1, tile), jnp.float32),           # running sum  l[j]
            pltpu.VMEM((c_p, tile), jnp.float32),         # accumulator  acc[:, j]
            pltpu.VMEM(hf_cache_shape, compute_dtype),    # hf cache (review 1)
        ],
    )

    # With the hf cache, every j tile of a batch must run on the core that
    # filled the cache at j == 0, so only batch is 'parallel' (on v7x keep
    # B >= 2 so both TensorCores get work); without the cache j is parallel.
    if cache_hf:
        sem = ("parallel", "arbitrary", "arbitrary")
    else:
        sem = ("parallel", "parallel", "arbitrary")

    out_flat = pl.pallas_call(
        kernel,
        out_shape=jax.ShapeDtypeStruct((b, c_p, n_pad), jnp.float32),
        grid_spec=grid_spec,
        compiler_params=pltpu.CompilerParams(
            dimension_semantics=sem,
            vmem_limit_bytes=vmem_limit),
    )(x_flat, x_flat, w_hf, b_hf, w_g, b_g, gamma_s)

    return out_flat[:, :c, :n].reshape(b, c, hh, ww)


def self_attention_ref(x_nchw, params, gamma):
    """Pure-JAX reference mirroring the PyTorch forward (scaling == 1)."""
    b, c, hh, ww = x_nchw.shape
    n = hh * ww
    wf, bf_, wg, bg, wh, bh = params
    x = x_nchw.reshape(b, c, n)                                      # (B, C, N)
    f_val = jnp.einsum('oc,bcn->bon', wf, x) + bf_[None, :, None]    # (B, Cl, N)
    g_val = jnp.einsum('oc,bcn->bon', wg, x) + bg[None, :, None]     # (B, Cl, N)
    h_val = jnp.einsum('oc,bcn->bon', wh, x) + bh[None, :, None]     # (B, C, N)
    attn = jnp.einsum('bci,bcj->bij', f_val, g_val)                  # (B, N, N)
    attn = jax.nn.softmax(attn, axis=-2)
    ret = jnp.einsum('bci,bij->bcj', h_val, attn).reshape(b, c, hh, ww)
    return gamma * ret + x_nchw


def init_params(key, n_in, factor):
    """nn.Conv2d(..., 1)-shaped params; weights kept in PyTorch (C_out, C_in)."""
    n_low = n_in // factor
    k = jax.random.split(key, 6)
    scale = 1.0 / jnp.sqrt(n_in)
    wf = jax.random.uniform(k[0], (n_low, n_in), jnp.float32, -scale, scale)
    bf_ = jax.random.uniform(k[1], (n_low,), jnp.float32, -scale, scale)
    wg = jax.random.uniform(k[2], (n_low, n_in), jnp.float32, -scale, scale)
    bg = jax.random.uniform(k[3], (n_low,), jnp.float32, -scale, scale)
    wh = jax.random.uniform(k[4], (n_in, n_in), jnp.float32, -scale, scale)
    bh = jax.random.uniform(k[5], (n_in,), jnp.float32, -scale, scale)
    return (wf, bf_, wg, bg, wh, bh)


if __name__ == "__main__":
    key = jax.random.PRNGKey(0)
    k_x, k_p, k_x2 = jax.random.split(key, 3)

    B, C, H, W = 2, 16, 16, 16        # N = 256
    FACTOR = 8                        # low-res channels = 2 (padded to 8)
    GAMMA_INIT = 0.5                  # nonzero so the attention path is exercised

    x = jax.random.normal(k_x, (B, C, H, W), jnp.float32)
    params = init_params(k_p, C, FACTOR)
    gamma = jnp.float32(GAMMA_INIT)
    ref = self_attention_ref(x, params, gamma)

    # 1) f32, 128-wide tiles: multi-tile online softmax + hf-cache reuse path.
    out = jax.block_until_ready(self_attention_pallas(x, params, gamma, tile=128))
    assert out.shape == (B, C, H, W)
    err = float(jnp.max(jnp.abs(out - ref)))
    assert jnp.allclose(out, ref, atol=2e-4, rtol=2e-4), (
        f"f32/tile128 mismatch vs reference: max abs err = {err:.3e}")

    # 2) bf16 MXU operands, default 256-wide tiles (softmax state stays f32).
    out_bf16 = jax.block_until_ready(
        self_attention_pallas(x, params, gamma, use_bf16=True))
    err = float(jnp.max(jnp.abs(out_bf16 - ref)))
    assert jnp.allclose(out_bf16, ref, atol=2e-2, rtol=2e-2), (
        f"bf16 mismatch vs reference: max abs err = {err:.3e}")

    # 3) non-128-multiple spatial size -> padding + masking; no-cache fallback.
    H2 = W2 = 12                      # N = 144 -> padded to 256
    x2 = jax.random.normal(k_x2, (B, C, H2, W2), jnp.float32)
    ref2 = self_attention_ref(x2, params, gamma)
    out2 = jax.block_until_ready(
        self_attention_pallas(x2, params, gamma, tile=128, cache_hf=False))
    err = float(jnp.max(jnp.abs(out2 - ref2)))
    assert jnp.allclose(out2, ref2, atol=2e-4, rtol=2e-4), (
        f"padded/no-cache mismatch vs reference: max abs err = {err:.3e}")

    print("KERNEL_OK")
</pallas_src>

<mosaic_0001>
module attributes {stable_mosaic.version = 11 : i64} {
  func.func @_self_attention_kernel(%arg0: i32, %arg1: i32, %arg2: i32, %arg3: memref<1x16x128xf32, #tpu.memory_space<vmem>>, %arg4: memref<1x16x128xf32, #tpu.memory_space<vmem>>, %arg5: memref<24x16xf32, #tpu.memory_space<vmem>>, %arg6: memref<24x1xf32, #tpu.memory_space<vmem>>, %arg7: memref<8x16xf32, #tpu.memory_space<vmem>>, %arg8: memref<8x1xf32, #tpu.memory_space<vmem>>, %arg9: memref<1xf32, #tpu.memory_space<smem>>, %arg10: memref<1x16x128xf32, #tpu.memory_space<vmem>>, %arg11: memref<8x128xf32, #tpu.memory_space<vmem>>, %arg12: memref<1x128xf32, #tpu.memory_space<vmem>>, %arg13: memref<1x128xf32, #tpu.memory_space<vmem>>, %arg14: memref<16x128xf32, #tpu.memory_space<vmem>>, %arg15: memref<2x24x128xf32, #tpu.memory_space<vmem>>) attributes {dimension_semantics = [#tpu.dimension_semantics<parallel>, #tpu.dimension_semantics<arbitrary>, #tpu.dimension_semantics<arbitrary>], iteration_bounds = array<i64: 2, 2, 2>, scalar_prefetch = 0 : i64, scratch_operands = 5 : i64, tpu.core_type = #tpu.core_type<tc>, window_params = [{transform_indices = @transform_0, window_bounds = array<i64: 1, 16, 128>}, {transform_indices = @transform_1, window_bounds = array<i64: 1, 16, 128>}, {pipeline_mode = #tpu.pipeline_mode<synchronous>, transform_indices = @transform_2, window_bounds = array<i64: 24, 16>}, {pipeline_mode = #tpu.pipeline_mode<synchronous>, transform_indices = @transform_3, window_bounds = array<i64: 24, 1>}, {pipeline_mode = #tpu.pipeline_mode<synchronous>, transform_indices = @transform_4, window_bounds = array<i64: 8, 16>}, {pipeline_mode = #tpu.pipeline_mode<synchronous>, transform_indices = @transform_5, window_bounds = array<i64: 8, 1>}, {transform_indices = @transform_6, window_bounds = array<i64: 1>}, {transform_indices = @transform_7, window_bounds = array<i64: 1, 16, 128>}]} {
    %c0 = arith.constant 0 : index
    %c0_0 = arith.constant 0 : index
    %c0_1 = arith.constant 0 : index
    %0 = vector.load %arg3[%c0, %c0_0, %c0_1] : memref<1x16x128xf32, #tpu.memory_space<vmem>>, vector<1x16x128xf32>
    %1 = vector.shape_cast %0 : vector<1x16x128xf32> to vector<16x128xf32>
    %c0_2 = arith.constant 0 : index
    %c0_3 = arith.constant 0 : index
    %c0_4 = arith.constant 0 : index
    %2 = vector.load %arg4[%c0_2, %c0_3, %c0_4] : memref<1x16x128xf32, #tpu.memory_space<vmem>>, vector<1x16x128xf32>
    %3 = vector.shape_cast %2 : vector<1x16x128xf32> to vector<16x128xf32>
    %c0_i32 = arith.constant 0 : i32
    %4 = arith.cmpi eq, %arg2, %c0_i32 : i32
    %5 = arith.extui %4 : i1 to i32
    %c0_i32_5 = arith.constant 0 : i32
    %6 = arith.cmpi ne, %5, %c0_i32_5 : i32
    scf.if %6 {
      %cst_28 = arith.constant 0xFF800000 : f32
      %42 = vector.broadcast %cst_28 : f32 to vector<1x128xf32>
      %c0_29 = arith.constant 0 : index
      %c0_30 = arith.constant 0 : index
      %43 = vector.load %arg12[%c0_29, %c0_30] : memref<1x128xf32, #tpu.memory_space<vmem>>, vector<1x128xf32>
      tpu.vector_store %arg12[%c0_29, %c0_30], %42 {strides = array<i32>} : memref<1x128xf32, #tpu.memory_space<vmem>>, vector<1x128xf32>,
      %cst_31 = arith.constant 0.000000e+00 : f32
      %44 = vector.broadcast %cst_31 : f32 to vector<1x128xf32>
      %c0_32 = arith.constant 0 : index
      %c0_33 = arith.constant 0 : index
      %45 = vector.load %arg13[%c0_32, %c0_33] : memref<1x128xf32, #tpu.memory_space<vmem>>, vector<1x128xf32>
      tpu.vector_store %arg13[%c0_32, %c0_33], %44 {strides = array<i32>} : memref<1x128xf32, #tpu.memory_space<vmem>>, vector<1x128xf32>,
      %cst_34 = arith.constant 0.000000e+00 : f32
      %46 = vector.broadcast %cst_34 : f32 to vector<16x128xf32>
      %c0_35 = arith.constant 0 : index
      %c0_36 = arith.constant 0 : index
      %47 = vector.load %arg14[%c0_35, %c0_36] : memref<16x128xf32, #tpu.memory_space<vmem>>, vector<16x128xf32>
      tpu.vector_store %arg14[%c0_35, %c0_36], %46 {strides = array<i32>} : memref<16x128xf32, #tpu.memory_space<vmem>>, vector<16x128xf32>,
      %c0_37 = arith.constant 0 : index
      %c0_38 = arith.constant 0 : index
      %48 = vector.load %arg7[%c0_37, %c0_38] : memref<8x16xf32, #tpu.memory_space<vmem>>, vector<8x16xf32>
      %cst_39 = arith.constant dense<0.000000e+00> : vector<8x128xf32>
      %49 = tpu.matmul %48, %1, %cst_39 {dimension_numbers = #tpu.dot_dimension_numbers<[1], [0], [0], [1], [0, 0, 1, 1], [], []>} : vector<8x16xf32>, vector<16x128xf32>, vector<8x128xf32> -> vector<8x128xf32>
      %c0_40 = arith.constant 0 : index
      %c0_41 = arith.constant 0 : index
      %50 = vector.load %arg8[%c0_40, %c0_41] : memref<8x1xf32, #tpu.memory_space<vmem>>, vector<8x1xf32>
      %51 = vector.broadcast %50 : vector<8x1xf32> to vector<8x128xf32>
      %52 = arith.addf %49, %51 : vector<8x128xf32>
      %c0_42 = arith.constant 0 : index
      %c0_43 = arith.constant 0 : index
      %53 = vector.load %arg11[%c0_42, %c0_43] : memref<8x128xf32, #tpu.memory_space<vmem>>, vector<8x128xf32>
      tpu.vector_store %arg11[%c0_42, %c0_43], %52 {strides = array<i32>} : memref<8x128xf32, #tpu.memory_space<vmem>>, vector<8x128xf32>,
    } else {
    }
    %c0_i32_6 = arith.constant 0 : i32
    %7 = arith.cmpi eq, %arg1, %c0_i32_6 : i32
    %8 = arith.extui %7 : i1 to i32
    %c0_i32_7 = arith.constant 0 : i32
    %9 = arith.cmpi ne, %8, %c0_i32_7 : i32
    scf.if %9 {
      %c0_28 = arith.constant 0 : index
      %c0_29 = arith.constant 0 : index
      %42 = vector.load %arg5[%c0_28, %c0_29] : memref<24x16xf32, #tpu.memory_space<vmem>>, vector<24x16xf32>
      %cst_30 = arith.constant dense<0.000000e+00> : vector<24x128xf32>
      %43 = tpu.matmul %42, %3, %cst_30 {dimension_numbers = #tpu.dot_dimension_numbers<[1], [0], [0], [1], [0, 0, 1, 1], [], []>} : vector<24x16xf32>, vector<16x128xf32>, vector<24x128xf32> -> vector<24x128xf32>
      %c0_31 = arith.constant 0 : index
      %c0_32 = arith.constant 0 : index
      %44 = vector.load %arg6[%c0_31, %c0_32] : memref<24x1xf32, #tpu.memory_space<vmem>>, vector<24x1xf32>
      %45 = vector.broadcast %44 : vector<24x1xf32> to vector<24x128xf32>
      %46 = arith.addf %43, %45 : vector<24x128xf32>
      %47 = arith.index_cast %arg2 : i32 to index
      %c0_33 = arith.constant 0 : index
      %c0_34 = arith.constant 0 : index
      %48 = vector.load %arg15[%47, %c0_33, %c0_34] : memref<2x24x128xf32, #tpu.memory_space<vmem>>, vector<1x24x128xf32>
      %49 = vector.shape_cast %48 : vector<1x24x128xf32> to vector<24x128xf32>
      %50 = vector.shape_cast %46 : vector<24x128xf32> to vector<1x24x128xf32>
      tpu.vector_store %arg15[%47, %c0_33, %c0_34], %50 {strides = array<i32>} : memref<2x24x128xf32, #tpu.memory_space<vmem>>, vector<1x24x128xf32>,
    } else {
    }
    %10 = arith.index_cast %arg2 : i32 to index
    %c0_8 = arith.constant 0 : index
    %c0_9 = arith.constant 0 : index
    %11 = vector.load %arg15[%10, %c0_8, %c0_9] : memref<2x24x128xf32, #tpu.memory_space<vmem>>, vector<1x24x128xf32>
    %12 = vector.shape_cast %11 : vector<1x24x128xf32> to vector<24x128xf32>
    %13 = vector.extract_strided_slice %12 {offsets = [0, 0], sizes = [16, 128], strides = [1, 1]} : vector<24x128xf32> to vector<16x128xf32>
    %14 = vector.extract_strided_slice %12 {offsets = [16, 0], sizes = [8, 128], strides = [1, 1]} : vector<24x128xf32> to vector<8x128xf32>
    %c0_10 = arith.constant 0 : index
    %c0_11 = arith.constant 0 : index
    %15 = vector.load %arg11[%c0_10, %c0_11] : memref<8x128xf32, #tpu.memory_space<vmem>>, vector<8x128xf32>
    %cst = arith.constant dense<0.000000e+00> : vector<128x128xf32>
    %16 = tpu.matmul %14, %15, %cst {dimension_numbers = #tpu.dot_dimension_numbers<[0], [0], [1], [1], [0, 1, 1, 1], [], []>} : vector<8x128xf32>, vector<8x128xf32>, vector<128x128xf32> -> vector<128x128xf32>
    %c0_12 = arith.constant 0 : index
    %c0_13 = arith.constant 0 : index
    %17 = vector.load %arg12[%c0_12, %c0_13] : memref<1x128xf32, #tpu.memory_space<vmem>>, vector<1x128xf32>
    %cst_14 = arith.constant dense<0xFF800000> : vector<128xf32>
    %18 = vector.multi_reduction <maximumf>, %16, %cst_14 [0] : vector<128x128xf32> to vector<128xf32>
    %19 = vector.shape_cast %18 : vector<128xf32> to vector<1x128xf32>
    %20 = arith.maximumf %17, %19 : vector<1x128xf32>
    %21 = arith.subf %17, %20 : vector<1x128xf32>
    %22 = math.exp %21 : vector<1x128xf32>
    %23 = vector.broadcast %20 : vector<1x128xf32> to vector<128x128xf32>
    %24 = arith.subf %16, %23 : vector<128x128xf32>
    %25 = math.exp %24 : vector<128x128xf32>
    %c0_15 = arith.constant 0 : index
    %c0_16 = arith.constant 0 : index
    %26 = vector.load %arg13[%c0_15, %c0_16] : memref<1x128xf32, #tpu.memory_space<vmem>>, vector<1x128xf32>
    %27 = arith.mulf %22, %26 : vector<1x128xf32>
    %cst_17 = arith.constant dense<0.000000e+00> : vector<128xf32>
    %28 = vector.multi_reduction <add>, %25, %cst_17 [0] : vector<128x128xf32> to vector<128xf32>
    %29 = vector.shape_cast %28 : vector<128xf32> to vector<1x128xf32>
    %30 = arith.addf %27, %29 : vector<1x128xf32>
    %c0_18 = arith.constant 0 : index
    %c0_19 = arith.constant 0 : index
    %31 = vector.load %arg13[%c0_18, %c0_19] : memref<1x128xf32, #tpu.memory_space<vmem>>, vector<1x128xf32>
    tpu.vector_store %arg13[%c0_18, %c0_19], %30 {strides = array<i32>} : memref<1x128xf32, #tpu.memory_space<vmem>>, vector<1x128xf32>,
    %c0_20 = arith.constant 0 : index
    %c0_21 = arith.constant 0 : index
    %32 = vector.load %arg14[%c0_20, %c0_21] : memref<16x128xf32, #tpu.memory_space<vmem>>, vector<16x128xf32>
    %33 = vector.broadcast %22 : vector<1x128xf32> to vector<16x128xf32>
    %34 = arith.mulf %33, %32 : vector<16x128xf32>
    %cst_22 = arith.constant dense<0.000000e+00> : vector<16x128xf32>
    %35 = tpu.matmul %13, %25, %cst_22 {dimension_numbers = #tpu.dot_dimension_numbers<[1], [0], [0], [1], [0, 0, 1, 1], [], []>} : vector<16x128xf32>, vector<128x128xf32>, vector<16x128xf32> -> vector<16x128xf32>
    %36 = arith.addf %34, %35 : vector<16x128xf32>
    %c0_23 = arith.constant 0 : index
    %c0_24 = arith.constant 0 : index
    %37 = vector.load %arg14[%c0_23, %c0_24] : memref<16x128xf32, #tpu.memory_space<vmem>>, vector<16x128xf32>
    tpu.vector_store %arg14[%c0_23, %c0_24], %36 {strides = array<i32>} : memref<16x128xf32, #tpu.memory_space<vmem>>, vector<16x128xf32>,
    %c0_25 = arith.constant 0 : index
    %c0_26 = arith.constant 0 : index
    %38 = vector.load %arg12[%c0_25, %c0_26] : memref<1x128xf32, #tpu.memory_space<vmem>>, vector<1x128xf32>
    tpu.vector_store %arg12[%c0_25, %c0_26], %20 {strides = array<i32>} : memref<1x128xf32, #tpu.memory_space<vmem>>, vector<1x128xf32>,
    %c1_i32 = arith.constant 1 : i32
    %39 = arith.cmpi eq, %arg2, %c1_i32 : i32
    %40 = arith.extui %39 : i1 to i32
    %c0_i32_27 = arith.constant 0 : i32
    %41 = arith.cmpi ne, %40, %c0_i32_27 : i32
    scf.if %41 {
      %c0_28 = arith.constant 0 : index
      %c0_29 = arith.constant 0 : index
      %42 = vector.load %arg13[%c0_28, %c0_29] : memref<1x128xf32, #tpu.memory_space<vmem>>, vector<1x128xf32>
      %43 = tpu.reciprocal %42 {approx = true} : vector<1x128xf32> -> vector<1x128xf32>
      %44 = arith.mulf %42, %43 : vector<1x128xf32>
      %cst_30 = arith.constant 2.000000e+00 : f32
      %45 = vector.broadcast %cst_30 : f32 to vector<1x128xf32>
      %46 = arith.subf %45, %44 : vector<1x128xf32>
      %47 = arith.mulf %43, %46 : vector<1x128xf32>
      %c0_31 = arith.constant 0 : index
      %48 = memref.load %arg9[%c0_31] : memref<1xf32, #tpu.memory_space<smem>>
      %c0_32 = arith.constant 0 : index
      %c0_33 = arith.constant 0 : index
      %49 = vector.load %arg14[%c0_32, %c0_33] : memref<16x128xf32, #tpu.memory_space<vmem>>, vector<16x128xf32>
      %50 = vector.broadcast %47 : vector<1x128xf32> to vector<16x128xf32>
      %51 = arith.mulf %49, %50 : vector<16x128xf32>
      %52 = vector.broadcast %48 : f32 to vector<16x128xf32>
      %53 = arith.mulf %52, %51 : vector<16x128xf32>
      %54 = arith.addf %53, %1 : vector<16x128xf32>
      %c0_34 = arith.constant 0 : index
      %c0_35 = arith.constant 0 : index
      %c0_36 = arith.constant 0 : index
      %55 = vector.load %arg10[%c0_34, %c0_35, %c0_36] : memref<1x16x128xf32, #tpu.memory_space<vmem>>, vector<1x16x128xf32>
      %56 = vector.shape_cast %55 : vector<1x16x128xf32> to vector<16x128xf32>
      %57 = vector.shape_cast %54 : vector<16x128xf32> to vector<1x16x128xf32>
      tpu.vector_store %arg10[%c0_34, %c0_35, %c0_36], %57 {strides = array<i32>} : memref<1x16x128xf32, #tpu.memory_space<vmem>>, vector<1x16x128xf32>,
    } else {
    }
    return
  }
  func.func @transform_0(%arg0: i32, %arg1: i32, %arg2: i32) -> (i32, i32, i32) {
    %c0_i32 = arith.constant 0 : i32
    %c0_i32_0 = arith.constant 0 : i32
    return %arg0, %c0_i32, %arg1 : i32, i32, i32
  }
  func.func @transform_1(%arg0: i32, %arg1: i32, %arg2: i32) -> (i32, i32, i32) {
    %c0_i32 = arith.constant 0 : i32
    %c0_i32_0 = arith.constant 0 : i32
    return %arg0, %c0_i32, %arg2 : i32, i32, i32
  }
  func.func @transform_2(%arg0: i32, %arg1: i32, %arg2: i32) -> (i32, i32) {
    %c0_i32 = arith.constant 0 : i32
    %c0_i32_0 = arith.constant 0 : i32
    %c0_i32_1 = arith.constant 0 : i32
    return %c0_i32, %c0_i32_0 : i32, i32
  }
  func.func @transform_3(%arg0: i32, %arg1: i32, %arg2: i32) -> (i32, i32) {
    %c0_i32 = arith.constant 0 : i32
    %c0_i32_0 = arith.constant 0 : i32
    %c0_i32_1 = arith.constant 0 : i32
    return %c0_i32, %c0_i32_0 : i32, i32
  }
  func.func @transform_4(%arg0: i32, %arg1: i32, %arg2: i32) -> (i32, i32) {
    %c0_i32 = arith.constant 0 : i32
    %c0_i32_0 = arith.constant 0 : i32
    %c0_i32_1 = arith.constant 0 : i32
    return %c0_i32, %c0_i32_0 : i32, i32
  }
  func.func @transform_5(%arg0: i32, %arg1: i32, %arg2: i32) -> (i32, i32) {
    %c0_i32 = arith.constant 0 : i32
    %c0_i32_0 = arith.constant 0 : i32
    %c0_i32_1 = arith.constant 0 : i32
    return %c0_i32, %c0_i32_0 : i32, i32
  }
  func.func @transform_6(%arg0: i32, %arg1: i32, %arg2: i32) -> i32 {
    %c0_i32 = arith.constant 0 : i32
    %c0_i32_0 = arith.constant 0 : i32
    return %c0_i32 : i32
  }
  func.func @transform_7(%arg0: i32, %arg1: i32, %arg2: i32) -> (i32, i32, i32) {
    %c0_i32 = arith.constant 0 : i32
    %c0_i32_0 = arith.constant 0 : i32
    return %arg0, %c0_i32, %arg1 : i32, i32, i32
  }
}

</mosaic_0001>

<llo_original>
// kernel: tpu_custom_call.1
$region0: #{tpu_custom_call.1}
  #allocation0 [shape = 'u32[]', space=smem, size = 0x4, offset = 0x4, fixed_abs, tag = 'smem constant byte address 0x4 - core index']
  #allocation1 [shape = 'u32[144,128]{1,0:T(1,128)}', space=vmem, size = 0x12000, scoped, tag = 'internal scratch']
  #allocation2 [shape = 'f32[8,128]{1,0:T(8,128)}', space=vmem, size = 0x1000, scoped, tag = 'scratch operand']
  #allocation3 [shape = 'f32[1,128]{1,0:T(1,128)}', space=vmem, size = 0x200, scoped, tag = 'scratch operand']
  #allocation4 [shape = 'f32[1,128]{1,0:T(1,128)}', space=vmem, size = 0x200, scoped, tag = 'scratch operand']
  #allocation5 [shape = 'f32[16,128]{1,0:T(8,128)}', space=vmem, size = 0x2000, scoped, tag = 'scratch operand']
  #allocation6 [shape = 'f32[2,24,128]{2,1,0:T(8,128)}', space=vmem, size = 0x6000, scoped, tag = 'scratch operand']
  #allocation7 [shape = 'f32[1]{0:T(128)S(6)}', space=smem, size = 0x200, scoped, tag = 'scoped memory for tpu_custom_call.1']
  %s0 = inlined_call_operand.vmem [shape: f32[2,16,256], index: 0, kind: input, shape index: {}]
  %s1 = inlined_call_operand.hbm [shape: f32[2,16,256], index: 1, kind: input, shape index: {}]
  %s2 = inlined_call_operand.vmem [shape: f32[24,16], index: 2, kind: input, shape index: {}]
  %s3 = inlined_call_operand.vmem [shape: f32[24,1], index: 3, kind: input, shape index: {}]
  %s4 = inlined_call_operand.vmem [shape: f32[8,16], index: 4, kind: input, shape index: {}]
  %s5 = inlined_call_operand.vmem [shape: f32[8,1], index: 5, kind: input, shape index: {}]
  %s6 = inlined_call_operand.<no memory space> [shape: f32[1], index: 6, kind: input, shape index: {}]
  %s7 = inlined_call_operand.hbm [shape: f32[2,16,256], index: 7, kind: output, shape index: {}]
  %s8 = sld [smem:[#allocation0]]
  $region115: #{tpu_custom_call.1} parent=0
    _
  %s10 = ssub.s32 1, %s8
  %s11 = scalar_select 0, %s10, %s8
  %12 = sst [smem:[#allocation7]] %s6
  $region1: #{tpu_custom_call.1} parent=0
    #allocation8 [shape = 'u8[16384]{0}', space=vmem, size = 0x4000, scoped, tag = 'input window, operand 0']
    #allocation9 [shape = 'u8[16384]{0}', space=vmem, size = 0x4000, scoped, tag = 'input window, operand 1']
    #allocation10 [shape = 's32[2]{0}', space=sflag, size = 0x8, scoped, tag = 'scoped memory for tpu_custom_call.1']
    #allocation11 [shape = 's32[2]{0}', space=sflag, size = 0x8, scoped, tag = 'scoped memory for tpu_custom_call.1']
    #allocation12 [shape = 'u8[16384]{0}', space=vmem, size = 0x4000, scoped, tag = 'output window, operand 0']
    %13 = vsyncpa [#allocation10], 0
    %s14 = scalar_lea.sflag [#allocation10], 1
    %15 = vsyncpa %s14, 0
    %16 = vsyncpa [#allocation11], 0
    %s17 = scalar_lea.sflag [#allocation11], 1
    %18 = vsyncpa %s17, 0
    loop: start=0, step=1, limit=10
    $region2: #{tpu_custom_call.1} parent=1 // loop_pre_header
      _
    $region3: #{tpu_custom_call.1} parent=1 // loop_header
      %s20 = sphi 0, %s24
      %p21 = scmp.ge.s32.totalorder %s20, 10
      %s27 = sphi 0, %s46
      %s28 = sphi 0, %s42
      %s29 = sphi 0, %s38
      %s30 = sphi 0, %s27
      %s31 = sphi 0, %s28
      %s32 = sphi 0, %s29
      %s33 = sphi 0, %s30
      %s34 = sphi 0, %s31
      %s35 = sphi 0, %s32
      %s51 = sphi 0, %s53
      %s54 = sphi 0, %s51
      %s55 = sphi 0, %s54
      %s71 = sphi 0, %s55
      %s79 = sphi 0, %s81
      %s82 = sphi 0, %s79
      %s83 = sphi 0, %s82
      %s99 = sphi 0, %s83
      %s103 = sphi 0, %s103
      %s105 = sphi 0, %s103
      %s106 = sphi 0, %s105
      %s120 = sphi 0, %s106
      %s124 = sphi 0, %s124
      %s126 = sphi 0, %s124
      %s127 = sphi 0, %s126
      %s141 = sphi 0, %s127
      %s145 = sphi 0, %s145
      %s147 = sphi 0, %s145
      %s148 = sphi 0, %s147
      %s162 = sphi 0, %s148
      %s166 = sphi 0, %s166
      %s168 = sphi 0, %s166
      %s169 = sphi 0, %s168
      %s183 = sphi 0, %s169
      %s187 = sphi 0, %s187
      %s189 = sphi 0, %s187
      %s190 = sphi 0, %s189
      %s204 = sphi 0, %s190
      %s212 = sphi 0, %s214
      %s215 = sphi 0, %s212
      %s216 = sphi 0, %s215
      %s232 = sphi 0, %s216
    $region4: #{tpu_custom_call.1} parent=1 // loop_header_branch
      %23 = sbr.rel (%p21) target = $region8
    $region5: #{tpu_custom_call.1} parent=1 // loop_body
      %s25 = ssub.s32 %s20, 1
      %s26 = ssub.s32 %s20, 2
      %s36 = sadd.s32 1, %s29
      %p37 = scmp.ge.s32.totalorder %s36, 2
      %s38 = scalar_select %p37, 0, %s36
      %s39 = sadd.s32 1, %s28
      %s40 = scalar_select %p37, %s39, %s28
      %p41 = scmp.ge.s32.totalorder %s40, 2
      %s42 = scalar_select %p41, 0, %s40
      %s43 = sadd.s32 1, %s27
      %s44 = scalar_select %p41, %s43, %s27
      %p45 = scmp.ge.s32.totalorder %s44, 2
      %s46 = scalar_select %p45, 0, %s44
      %s47 = ssub.s32 %s27, %s46
      %s48 = ssub.s32 %s28, %s42
      %s49 = sor.u32 %s47, %s48
      %p50 = scmp.eq.s32.totalorder %s49, 0
      %s52 = sadd.s32 %s51, 1
      %s53 = scalar_select %p50, %s51, %s52
      %p56 = pneg %p50
      %p57 = scmp.eq.s32.totalorder %s20, 7
      %p58 = por %p56, %p57
      %p59 = scmp.ne.s32.totalorder %s51, %s54
      %p60 = scmp.eq.s32.totalorder %s20, 0
      %p61 = por %p59, %p60
      %p62 = scmp.ne.s32.totalorder %s51, %s54
      %p63 = scmp.eq.s32.totalorder %s25, 7
      %p64 = por %p62, %p63
      %p65 = scmp.ne.s32.totalorder %s54, %s55
      %p66 = scmp.eq.s32.totalorder %s25, 0
      %p67 = por %p65, %p66
      %p68 = scmp.ne.s32.totalorder %s54, %s55
      %p69 = scmp.eq.s32.totalorder %s26, 7
      %p70 = por %p68, %p69
      %p72 = scmp.ne.s32.totalorder %s55, %s71
      %p73 = scmp.eq.s32.totalorder %s26, 0
      %p74 = por %p72, %p73
      %s75 = ssub.s32 %s27, %s46
      %s76 = ssub.s32 %s29, %s38
      %s77 = sor.u32 %s75, %s76
      %p78 = scmp.eq.s32.totalorder %s77, 0
      %s80 = sadd.s32 %s79, 1
      %s81 = scalar_select %p78, %s79, %s80
      %p84 = pneg %p78
      %p85 = scmp.eq.s32.totalorder %s20, 7
      %p86 = por %p84, %p85
      %p87 = scmp.ne.s32.totalorder %s79, %s82
      %p88 = scmp.eq.s32.totalorder %s20, 0
      %p89 = por %p87, %p88
      %p90 = scmp.ne.s32.totalorder %s79, %s82
      %p91 = scmp.eq.s32.totalorder %s25, 7
      %p92 = por %p90, %p91
      %p93 = scmp.ne.s32.totalorder %s82, %s83
      %p94 = scmp.eq.s32.totalorder %s25, 0
      %p95 = por %p93, %p94
      %p96 = scmp.ne.s32.totalorder %s82, %s83
      %p97 = scmp.eq.s32.totalorder %s26, 7
      %p98 = por %p96, %p97
      %p100 = scmp.ne.s32.totalorder %s83, %s99
      %p101 = scmp.eq.s32.totalorder %s26, 0
      %p102 = por %p100, %p101
      %s104 = sadd.s32 %s103, 1
      %p107 = scmp.eq.s32.totalorder %s20, 7
      %p108 = scmp.ne.s32.totalorder %s103, %s105
      %p109 = scmp.eq.s32.totalorder %s20, 0
      %p110 = por %p108, %p109
      %p111 = scmp.ne.s32.totalorder %s103, %s105
      %p112 = scmp.eq.s32.totalorder %s25, 7
      %p113 = por %p111, %p112
      %p114 = scmp.ne.s32.totalorder %s105, %s106
      %p115 = scmp.eq.s32.totalorder %s25, 0
      %p116 = por %p114, %p115
      %p117 = scmp.ne.s32.totalorder %s105, %s106
      %p118 = scmp.eq.s32.totalorder %s26, 7
      %p119 = por %p117, %p118
      %p121 = scmp.ne.s32.totalorder %s106, %s120
      %p122 = scmp.eq.s32.totalorder %s26, 0
      %p123 = por %p121, %p122
      %s125 = sadd.s32 %s124, 1
      %p128 = scmp.eq.s32.totalorder %s20, 7
      %p129 = scmp.ne.s32.totalorder %s124, %s126
      %p130 = scmp.eq.s32.totalorder %s20, 0
      %p131 = por %p129, %p130
      %p132 = scmp.ne.s32.totalorder %s124, %s126
      %p133 = scmp.eq.s32.totalorder %s25, 7
      %p134 = por %p132, %p133
      %p135 = scmp.ne.s32.totalorder %s126, %s127
      %p136 = scmp.eq.s32.totalorder %s25, 0
      %p137 = por %p135, %p136
      %p138 = scmp.ne.s32.totalorder %s126, %s127
      %p139 = scmp.eq.s32.totalorder %s26, 7
      %p140 = por %p138, %p139
      %p142 = scmp.ne.s32.totalorder %s127, %s141
      %p143 = scmp.eq.s32.totalorder %s26, 0
      %p144 = por %p142, %p143
      %s146 = sadd.s32 %s145, 1
      %p149 = scmp.eq.s32.totalorder %s20, 7
      %p150 = scmp.ne.s32.totalorder %s145, %s147
      %p151 = scmp.eq.s32.totalorder %s20, 0
      %p152 = por %p150, %p151
      %p153 = scmp.ne.s32.totalorder %s145, %s147
      %p154 = scmp.eq.s32.totalorder %s25, 7
      %p155 = por %p153, %p154
      %p156 = scmp.ne.s32.totalorder %s147, %s148
      %p157 = scmp.eq.s32.totalorder %s25, 0
      %p158 = por %p156, %p157
      %p159 = scmp.ne.s32.totalorder %s147, %s148
      %p160 = scmp.eq.s32.totalorder %s26, 7
      %p161 = por %p159, %p160
      %p163 = scmp.ne.s32.totalorder %s148, %s162
      %p164 = scmp.eq.s32.totalorder %s26, 0
      %p165 = por %p163, %p164
      %s167 = sadd.s32 %s166, 1
      %p170 = scmp.eq.s32.totalorder %s20, 7
      %p171 = scmp.ne.s32.totalorder %s166, %s168
      %p172 = scmp.eq.s32.totalorder %s20, 0
      %p173 = por %p171, %p172
      %p174 = scmp.ne.s32.totalorder %s166, %s168
      %p175 = scmp.eq.s32.totalorder %s25, 7
      %p176 = por %p174, %p175
      %p177 = scmp.ne.s32.totalorder %s168, %s169
      %p178 = scmp.eq.s32.totalorder %s25, 0
      %p179 = por %p177, %p178
      %p180 = scmp.ne.s32.totalorder %s168, %s169
      %p181 = scmp.eq.s32.totalorder %s26, 7
      %p182 = por %p180, %p181
      %p184 = scmp.ne.s32.totalorder %s169, %s183
      %p185 = scmp.eq.s32.totalorder %s26, 0
      %p186 = por %p184, %p185
      %s188 = sadd.s32 %s187, 1
      %p191 = scmp.eq.s32.totalorder %s20, 7
      %p192 = scmp.ne.s32.totalorder %s187, %s189
      %p193 = scmp.eq.s32.totalorder %s20, 0
      %p194 = por %p192, %p193
      %p195 = scmp.ne.s32.totalorder %s187, %s189
      %p196 = scmp.eq.s32.totalorder %s25, 7
      %p197 = por %p195, %p196
      %p198 = scmp.ne.s32.totalorder %s189, %s190
      %p199 = scmp.eq.s32.totalorder %s25, 0
      %p200 = por %p198, %p199
      %p201 = scmp.ne.s32.totalorder %s189, %s190
      %p202 = scmp.eq.s32.totalorder %s26, 7
      %p203 = por %p201, %p202
      %p205 = scmp.ne.s32.totalorder %s190, %s204
      %p206 = scmp.eq.s32.totalorder %s26, 0
      %p207 = por %p205, %p206
      %s208 = ssub.s32 %s27, %s46
      %s209 = ssub.s32 %s28, %s42
      %s210 = sor.u32 %s208, %s209
      %p211 = scmp.eq.s32.totalorder %s210, 0
      %s213 = sadd.s32 %s212, 1
      %s214 = scalar_select %p211, %s212, %s213
      %p217 = pneg %p211
      %p218 = scmp.eq.s32.totalorder %s20, 7
      %p219 = por %p217, %p218
      %p220 = scmp.ne.s32.totalorder %s212, %s215
      %p221 = scmp.eq.s32.totalorder %s20, 0
      %p222 = por %p220, %p221
      %p223 = scmp.ne.s32.totalorder %s212, %s215
      %p224 = scmp.eq.s32.totalorder %s25, 7
      %p225 = por %p223, %p224
      %p226 = scmp.ne.s32.totalorder %s215, %s216
      %p227 = scmp.eq.s32.totalorder %s25, 0
      %p228 = por %p226, %p227
      %p229 = scmp.ne.s32.totalorder %s215, %s216
      %p230 = scmp.eq.s32.totalorder %s26, 7
      %p231 = por %p229, %p230
      %p233 = scmp.ne.s32.totalorder %s216, %s232
      %p234 = scmp.eq.s32.totalorder %s26, 0
      %p235 = por %p233, %p234
      %p236 = scmp.le.s32.totalorder 1, %s20
      %p237 = scmp.lt.s32.totalorder %s20, 9
      %p238 = pnand %p236, %p237
      %p239 = pneg %p238
      // Predicated region
      $region9: #{tpu_custom_call.1} parent=5 // pred_check
        _
      $region10: #{tpu_custom_call.1} parent=5 // pred_check_branch
        %241 = sbr.rel (%p238) target = $region12
      $region11: #{tpu_custom_call.1} parent=5 // pred_region
        %s242 = ssub.s32 %s20, 1
        // Predicated region
        $region13: #{tpu_custom_call.1} parent=11 // pred_check
          %p243 = pneg %p116
        $region14: #{tpu_custom_call.1} parent=11 // pred_check_branch
          %245 = sbr.rel (%p243) target = $region16
        $region15: #{tpu_custom_call.1} parent=11 // pred_region
          _
        $region16: #{tpu_custom_call.1} parent=11 // pred_fallthru
          _
        // Predicated region
        $region17: #{tpu_custom_call.1} parent=11 // pred_check
          %p246 = pneg %p137
        $region18: #{tpu_custom_call.1} parent=11 // pred_check_branch
          %248 = sbr.rel (%p246) target = $region20
        $region19: #{tpu_custom_call.1} parent=11 // pred_region
          _
        $region20: #{tpu_custom_call.1} parent=11 // pred_fallthru
          _
        // Predicated region
        $region21: #{tpu_custom_call.1} parent=11 // pred_check
          %p249 = pneg %p158
        $region22: #{tpu_custom_call.1} parent=11 // pred_check_branch
          %251 = sbr.rel (%p249) target = $region24
        $region23: #{tpu_custom_call.1} parent=11 // pred_region
          _
        $region24: #{tpu_custom_call.1} parent=11 // pred_fallthru
          _
        // Predicated region
        $region25: #{tpu_custom_call.1} parent=11 // pred_check
          %p252 = pneg %p179
        $region26: #{tpu_custom_call.1} parent=11 // pred_check_branch
          %254 = sbr.rel (%p252) target = $region28
        $region27: #{tpu_custom_call.1} parent=11 // pred_region
          _
        $region28: #{tpu_custom_call.1} parent=11 // pred_fallthru
          _
        // Predicated region
        $region29: #{tpu_custom_call.1} parent=11 // pred_check
          %p255 = pneg %p200
        $region30: #{tpu_custom_call.1} parent=11 // pred_check_branch
          %257 = sbr.rel (%p255) target = $region32
        $region31: #{tpu_custom_call.1} parent=11 // pred_region
          _
        $region32: #{tpu_custom_call.1} parent=11 // pred_fallthru
          _
      $region12: #{tpu_custom_call.1} parent=5 // pred_fallthru
        _
      %p258 = scmp.lt.s32.totalorder %s20, 8
      // Predicated region
      $region33: #{tpu_custom_call.1} parent=5 // pred_check
        %p259 = pneg %p258
      $region34: #{tpu_custom_call.1} parent=5 // pred_check_branch
        %261 = sbr.rel (%p259) target = $region36
      $region35: #{tpu_custom_call.1} parent=5 // pred_region
        // Predicated region
        $region37: #{tpu_custom_call.1} parent=35 // pred_check
          %p262 = pneg %p61
        $region38: #{tpu_custom_call.1} parent=35 // pred_check_branch
          %264 = sbr.rel (%p262) target = $region40
        $region39: #{tpu_custom_call.1} parent=35 // pred_region
          %s265 = sand.u32 %s51, 1
          %s266 = sand.u32 %s51, 1
          %s267 = smul.addr %s266, 16
          %s268 = scalar_lea.vmem [#allocation8], %s267
          %s269 = smul.addr %s27, 4
          %s270 = sadd.s32 %s28, %s269
          %s271 = smul.addr %s270, 8
          %s272 = scalar_lea.vmem %s0, %s271
          // Predicated region
          $region41: #{tpu_custom_call.1} parent=39 // pred_check
            _
          $region42: #{tpu_custom_call.1} parent=39 // pred_check_branch
            %274 = sbr.rel (0) target = $region44
          $region43: #{tpu_custom_call.1} parent=39 // pred_region
            // Predicated region
            $region45: #{tpu_custom_call.1} parent=43 // pred_check
              _
            $region46: #{tpu_custom_call.1} parent=43 // pred_check_branch
              %276 = sbr.rel (0) target = $region48
            $region47: #{tpu_custom_call.1} parent=43 // pred_region
              // Predicated region
              $region60: #{tpu_custom_call.1} parent=47 // pred_check
                _
              $region61: #{tpu_custom_call.1} parent=47 // pred_check_branch
                %294 = sbr.rel (0) target = $region63
              $region62: #{tpu_custom_call.1} parent=47 // pred_region
                loop: start=0, step=1, limit=1
                $region64: #{tpu_custom_call.1} parent=62 // loop_pre_header
                  _
                $region65: #{tpu_custom_call.1} parent=62 // loop_header
                  %s296 = sphi 0, %s300
                  %p297 = scmp.ge.s32.totalorder %s296, 1
                  %s301 = sphi %s272, %s272
                  %s302 = sphi %s268, %s268
                $region66: #{tpu_custom_call.1} parent=62 // loop_header_branch
                  %299 = sbr.rel (%p297) target = $region70
                $region67: #{tpu_custom_call.1} parent=62 // loop_body
                  %v303 = vld [vmem:[%s301] sm:$0xff]
                  %304 = vst [vmem:[%s302] sm:$0xff] %v303
                  %v305 = vld [vmem:[%s301 + $0x10] sm:$0xff]
                  %306 = vst [vmem:[%s302 + $0x8] sm:$0xff] %v305
                $region68: #{tpu_custom_call.1} parent=62 // loop_footer
                  %s300 = sadd.s32 1, %s296
                $region69: #{tpu_custom_call.1} parent=62 // loop_footer_branch
                  %295 = sbr.rel target = $region65
                $region70: #{tpu_custom_call.1} parent=62 // loop_exit
                  _
              $region63: #{tpu_custom_call.1} parent=47 // pred_fallthru
                _
              // Predicated region
              $region71: #{tpu_custom_call.1} parent=47 // pred_check
                _
              $region72: #{tpu_custom_call.1} parent=47 // pred_check_branch
                %308 = sbr.rel target = $region74
              $region73: #{tpu_custom_call.1} parent=47 // pred_region
                _
              $region74: #{tpu_custom_call.1} parent=47 // pred_fallthru
                _
            $region48: #{tpu_custom_call.1} parent=43 // pred_fallthru
              _
            // Predicated region
            $region49: #{tpu_custom_call.1} parent=43 // pred_check
              _
            $region50: #{tpu_custom_call.1} parent=43 // pred_check_branch
              %278 = sbr.rel target = $region52
            $region51: #{tpu_custom_call.1} parent=43 // pred_region
              %s280 = ssub.s32 256, 1
              loop: start=0, step=1, limit=1
              $region53: #{tpu_custom_call.1} parent=51 // loop_pre_header
                _
              $region54: #{tpu_custom_call.1} parent=51 // loop_header
                %s282 = sphi 0, %s286
                %p283 = scmp.ge.s32.totalorder %s282, 1
                %s287 = sphi %s272, %s272
                %s288 = sphi %s268, %s268
              $region55: #{tpu_custom_call.1} parent=51 // loop_header_branch
                %285 = sbr.rel (%p283) target = $region59
              $region56: #{tpu_custom_call.1} parent=51 // loop_body
                %v289 = vld [vmem:[%s287] sm:%s280]
                %290 = vst [vmem:[%s288] sm:%s280] %v289
                %v291 = vld [vmem:[%s287 + $0x10] sm:%s280]
                %292 = vst [vmem:[%s288 + $0x8] sm:%s280] %v291
              $region57: #{tpu_custom_call.1} parent=51 // loop_footer
                %s286 = sadd.s32 1, %s282
              $region58: #{tpu_custom_call.1} parent=51 // loop_footer_branch
                %281 = sbr.rel target = $region54
              $region59: #{tpu_custom_call.1} parent=51 // loop_exit
                _
            $region52: #{tpu_custom_call.1} parent=43 // pred_fallthru
              _
          $region44: #{tpu_custom_call.1} parent=39 // pred_fallthru
            _
          %309 = vnop
        $region40: #{tpu_custom_call.1} parent=35 // pred_fallthru
          _
        // Predicated region
        $region75: #{tpu_custom_call.1} parent=35 // pred_check
          %p310 = pneg %p89
        $region76: #{tpu_custom_call.1} parent=35 // pred_check_branch
          %312 = sbr.rel (%p310) target = $region78
        $region77: #{tpu_custom_call.1} parent=35 // pred_region
          %s313 = sand.u32 %s79, 1
          %s314 = scalar_lea.sflag [#allocation10], %s313
          %s315 = sand.u32 %s79, 1
          %s316 = smul.addr %s315, 16
          %s317 = scalar_lea.vmem [#allocation9], %s316
          %s319 = ssub.s32 256, 256
          %320 = vsyncadd %s314, %s319
          %s321 = smul.addr %s27, 4
          %s322 = sadd.s32 %s29, %s321
          %s323 = smul.addr %s322, 128
          %s324 = scalar_lea.hbm %s1, %s323
          %s325 = sshll.u32 %s317, 4
          %s326 = int_to_ptr.vmem [resolvable:$true] %s325
          %331 = dma.hbm_to_vmem [thread:$0]  %s324, 256, %s326, %s314, 256, 128, 8
        $region78: #{tpu_custom_call.1} parent=35 // pred_fallthru
          _
      $region36: #{tpu_custom_call.1} parent=5 // pred_fallthru
        _
      %p332 = scmp.le.s32.totalorder 1, %s20
      %p333 = scmp.lt.s32.totalorder %s20, 9
      %p334 = pnand %p332, %p333
      %p335 = pneg %p334
      // Predicated region
      $region79: #{tpu_custom_call.1} parent=5 // pred_check
        _
      $region80: #{tpu_custom_call.1} parent=5 // pred_check_branch
        %337 = sbr.rel (%p334) target = $region82
      $region81: #{tpu_custom_call.1} parent=5 // pred_region
        %s338 = ssub.s32 %s20, 1
        %s339 = sand.u32 %s54, 1
        %s340 = sand.u32 %s54, 1
        %s341 = smul.addr %s340, 16
        %s342 = scalar_lea.vmem [#allocation8], %s341
        // Predicated region
        $region83: #{tpu_custom_call.1} parent=81 // pred_check
          %p343 = pneg %p67
        $region84: #{tpu_custom_call.1} parent=81 // pred_check_branch
          %345 = sbr.rel (%p343) target = $region86
        $region85: #{tpu_custom_call.1} parent=81 // pred_region
          _
        $region86: #{tpu_custom_call.1} parent=81 // pred_fallthru
          _
        %s346 = sand.u32 %s82, 1
        %s347 = scalar_lea.sflag [#allocation10], %s346
        %s348 = sand.u32 %s82, 1
        %s349 = smul.addr %s348, 16
        %s350 = scalar_lea.vmem [#allocation9], %s349
        // Predicated region
        $region87: #{tpu_custom_call.1} parent=81 // pred_check
          %p351 = pneg %p95
        $region88: #{tpu_custom_call.1} parent=81 // pred_check_branch
          %353 = sbr.rel (%p351) target = $region90
        $region89: #{tpu_custom_call.1} parent=81 // pred_region
          %354 = dma.done %s347, 256
        $region90: #{tpu_custom_call.1} parent=81 // pred_fallthru
          _
        %s355 = sand.u32 %s54, 1
        %s356 = sand.u32 %s54, 1
        %s357 = smul.addr %s356, 16
        %s358 = scalar_lea.vmem [#allocation8], %s357
        %p359 = pneg %p67
        %p360 = pneg %p64
        %s361 = sand.u32 %s82, 1
        %s362 = scalar_lea.sflag [#allocation10], %s361
        %s363 = sand.u32 %s82, 1
        %s364 = smul.addr %s363, 16
        %s365 = scalar_lea.vmem [#allocation9], %s364
        %p366 = pneg %p95
        %p367 = pneg %p92
        %p368 = pneg %p116
        %p369 = pneg %p113
        %p370 = pneg %p137
        %p371 = pneg %p134
        %p372 = pneg %p158
        %p373 = pneg %p155
        %p374 = pneg %p179
        %p375 = pneg %p176
        %p376 = pneg %p200
        %p377 = pneg %p197
        %p378 = pneg %p228
        %p379 = pneg %p225
        %s380 = sand.u32 %s215, 1
        %s381 = scalar_lea.sflag [#allocation11], %s380
        %s382 = sand.u32 %s215, 1
        %s383 = smul.addr %s382, 16
        %s384 = scalar_lea.vmem [#allocation12], %s383
        %v385 = vld [vmem:[%s342] sm:$0xff]
        %v386 = vld [vmem:[%s342 + $0x8] sm:$0xff]
        %v387 = vld [vmem:[%s350] sm:$0xff]
        %v388 = vld [vmem:[%s350 + $0x8] sm:$0xff]
        %p389 = scmp.eq.s32.totalorder %s32, 0
        // Predicated region
        $region91: #{tpu_custom_call.1} parent=81 // pred_check
          %p390 = pneg %p389
        $region92: #{tpu_custom_call.1} parent=81 // pred_check_branch
          %392 = sbr.rel (%p390) target = $region94
        $region93: #{tpu_custom_call.1} parent=81 // pred_region
          %393 = vst [vmem:[#allocation3] sm:$0x1] -inf
          %394 = vst [vmem:[#allocation4] sm:$0x1] 0.0
          %395 = vst [vmem:[#allocation5] sm:$0xff] 0.0
          %396 = vst [vmem:[#allocation5 + $0x8] sm:$0xff] 0.0
          %v397 = vld [vmem:[%s4] sm:$0xff]
          %v398 = vld [vmem:[%s5] sm:$0xff]
          %400 = vset.pattern.permute.xlu0 0
          %401 = vperm.xlu0 %400, %v398
          %v402 = vpop.permute.xlu0 %401
          %vm404 = vcmask 130048
          %v406 = vsel %vm404, %v397, 0
          %408 = vmatprep.subr.mxu0 0.0
          %409 = vmatpush1.msra.mxu0 0.0
          %410 = vmatprep.subr.mxu0 0.0
          %411 = vmatpush1.msra.mxu0 0.0
          %412 = vmatprep.subr.mxu0 0.0
          %413 = vmatpush1.msra.mxu0 0.0
          %414 = vmatprep.subr.mxu0 0.0
          %415 = vmatpush1.msra.mxu0 0.0
          %416 = vmatprep.subr.mxu0 0.0
          %417 = vmatpush1.msra.mxu0 0.0
          %418 = vmatprep.subr.mxu0 0.0
          %419 = vmatpush1.msra.mxu0 0.0
          %420 = vmatprep.subr.mxu0 0.0
          %421 = vmatpush1.msra.mxu0 0.0
          %422 = vmatprep.subr.mxu0 0.0
          %423 = vmatpush1.msra.mxu0 0.0
          %424 = vmatprep.subr.mxu0 0.0
          %425 = vmatpush1.msra.mxu0 0.0
          %426 = vmatprep.subr.mxu0 0.0
          %427 = vmatpush1.msra.mxu0 0.0
          %428 = vmatprep.subr.mxu0 0.0
          %429 = vmatpush1.msra.mxu0 0.0
          %430 = vmatprep.subr.mxu0 0.0
          %431 = vmatpush1.msra.mxu0 0.0
          %432 = vmatprep.subr.mxu0 0.0
          %433 = vmatpush1.msra.mxu0 0.0
          %434 = vmatprep.subr.mxu0 0.0
          %435 = vmatpush1.msra.mxu0 0.0
          %436 = vmatprep.subr.mxu0 0.0
          %437 = vmatpush1.msra.mxu0 %v386
          %438 = vmatprep.subr.mxu0 0.0
          %439 = vmatpush1.msra.mxu0 %v385
          %440 = vmatprep.subr.mxu0 0.0
          %441 = vmatpush2.msra.mxu0 0.0
          %442 = vmatprep.subr.mxu0 0.0
          %443 = vmatpush2.msra.mxu0 0.0
          %444 = vmatprep.subr.mxu0 0.0
          %445 = vmatpush2.msra.mxu0 0.0
          %446 = vmatprep.subr.mxu0 0.0
          %447 = vmatpush2.msra.mxu0 0.0
          %448 = vmatprep.subr.mxu0 0.0
          %449 = vmatpush2.msra.mxu0 0.0
          %450 = vmatprep.subr.mxu0 0.0
          %451 = vmatpush2.msra.mxu0 0.0
          %452 = vmatprep.subr.mxu0 0.0
          %453 = vmatpush2.msra.mxu0 0.0
          %454 = vmatprep.subr.mxu0 0.0
          %455 = vmatpush2.msra.mxu0 0.0
          %456 = vmatprep.subr.mxu0 0.0
          %457 = vmatpush2.msra.mxu0 0.0
          %458 = vmatprep.subr.mxu0 0.0
          %459 = vmatpush2.msra.mxu0 0.0
          %460 = vmatprep.subr.mxu0 0.0
          %461 = vmatpush2.msra.mxu0 0.0
          %462 = vmatprep.subr.mxu0 0.0
          %463 = vmatpush2.msra.mxu0 0.0
          %464 = vmatprep.subr.mxu0 0.0
          %465 = vmatpush2.msra.mxu0 0.0
          %466 = vmatprep.subr.mxu0 0.0
          %467 = vmatpush2.msra.mxu0 0.0
          %468 = vmatprep.subr.mxu0 0.0
          %469 = vmatpush2.msra.mxu0 0.0
          %470 = vmatprep.subr.mxu0 0.0
          %471 = vmatpush2.msra.mxu0 0.0
          %472 = vmatprep.mubr.f32.mxu0 0.0
          %473 = vmatmul.mubr.f32.gmra.mxu0 %v406
          %v474 = vpop.f32.mrf.mxu0
          %v475 = vadd.f32 %v402, %v474
          %v476 = vpop.f32.mrf.mxu0
          %477 = vdwg.mxu0
          %478 = vst [vmem:[#allocation2] sm:$0xff] %v475
        $region94: #{tpu_custom_call.1} parent=81 // pred_fallthru
          _
        %p479 = scmp.eq.s32.totalorder %s31, 0
        // Predicated region
        $region95: #{tpu_custom_call.1} parent=81 // pred_check
          %p480 = pneg %p479
        $region96: #{tpu_custom_call.1} parent=81 // pred_check_branch
          %482 = sbr.rel (%p480) target = $region98
        $region97: #{tpu_custom_call.1} parent=81 // pred_region
          %v483 = vld [vmem:[%s2] sm:$0xff]
          %v484 = vld [vmem:[%s2 + $0x8] sm:$0xff]
          %v485 = vld [vmem:[%s2 + $0x10] sm:$0xff]
          %v486 = vld [vmem:[%s3] sm:$0xff]
          %v487 = vld [vmem:[%s3 + $0x8] sm:$0xff]
          %v488 = vld [vmem:[%s3 + $0x10] sm:$0xff]
          %490 = vset.pattern.permute.xlu0 0
          %491 = vperm.xlu0 %490, %v486
          %v492 = vpop.permute.xlu0 %491
          %495 = vset.pattern.permute.xlu0 0
          %496 = vperm.xlu0 %495, %v487
          %v497 = vpop.permute.xlu0 %496
          %500 = vset.pattern.permute.xlu0 0
          %501 = vperm.xlu0 %500, %v488
          %v502 = vpop.permute.xlu0 %501
          %vm504 = vcmask 130048
          %v506 = vsel %vm504, %v483, 0
          %v509 = vsel %vm504, %v484, 0
          %v512 = vsel %vm504, %v485, 0
          %514 = vmatprep.subr.mxu0 0.0
          %515 = vmatpush1.msra.mxu0 0.0
          %516 = vmatprep.subr.mxu0 0.0
          %517 = vmatpush1.msra.mxu0 0.0
          %518 = vmatprep.subr.mxu0 0.0
          %519 = vmatpush1.msra.mxu0 0.0
          %520 = vmatprep.subr.mxu0 0.0
          %521 = vmatpush1.msra.mxu0 0.0
          %522 = vmatprep.subr.mxu0 0.0
          %523 = vmatpush1.msra.mxu0 0.0
          %524 = vmatprep.subr.mxu0 0.0
          %525 = vmatpush1.msra.mxu0 0.0
          %526 = vmatprep.subr.mxu0 0.0
          %527 = vmatpush1.msra.mxu0 0.0
          %528 = vmatprep.subr.mxu0 0.0
          %529 = vmatpush1.msra.mxu0 0.0
          %530 = vmatprep.subr.mxu0 0.0
          %531 = vmatpush1.msra.mxu0 0.0
          %532 = vmatprep.subr.mxu0 0.0
          %533 = vmatpush1.msra.mxu0 0.0
          %534 = vmatprep.subr.mxu0 0.0
          %535 = vmatpush1.msra.mxu0 0.0
          %536 = vmatprep.subr.mxu0 0.0
          %537 = vmatpush1.msra.mxu0 0.0
          %538 = vmatprep.subr.mxu0 0.0
          %539 = vmatpush1.msra.mxu0 0.0
          %540 = vmatprep.subr.mxu0 0.0
          %541 = vmatpush1.msra.mxu0 0.0
          %542 = vmatprep.subr.mxu0 0.0
          %543 = vmatpush1.msra.mxu0 %v388
          %544 = vmatprep.subr.mxu0 0.0
          %545 = vmatpush1.msra.mxu0 %v387
          %546 = vmatprep.subr.mxu0 0.0
          %547 = vmatpush2.msra.mxu0 0.0
          %548 = vmatprep.subr.mxu0 0.0
          %549 = vmatpush2.msra.mxu0 0.0
          %550 = vmatprep.subr.mxu0 0.0
          %551 = vmatpush2.msra.mxu0 0.0
          %552 = vmatprep.subr.mxu0 0.0
          %553 = vmatpush2.msra.mxu0 0.0
          %554 = vmatprep.subr.mxu0 0.0
          %555 = vmatpush2.msra.mxu0 0.0
          %556 = vmatprep.subr.mxu0 0.0
          %557 = vmatpush2.msra.mxu0 0.0
          %558 = vmatprep.subr.mxu0 0.0
          %559 = vmatpush2.msra.mxu0 0.0
          %560 = vmatprep.subr.mxu0 0.0
          %561 = vmatpush2.msra.mxu0 0.0
          %562 = vmatprep.subr.mxu0 0.0
          %563 = vmatpush2.msra.mxu0 0.0
          %564 = vmatprep.subr.mxu0 0.0
          %565 = vmatpush2.msra.mxu0 0.0
          %566 = vmatprep.subr.mxu0 0.0
          %567 = vmatpush2.msra.mxu0 0.0
          %568 = vmatprep.subr.mxu0 0.0
          %569 = vmatpush2.msra.mxu0 0.0
          %570 = vmatprep.subr.mxu0 0.0
          %571 = vmatpush2.msra.mxu0 0.0
          %572 = vmatprep.subr.mxu0 0.0
          %573 = vmatpush2.msra.mxu0 0.0
          %574 = vmatprep.subr.mxu0 0.0
          %575 = vmatpush2.msra.mxu0 0.0
          %576 = vmatprep.subr.mxu0 0.0
          %577 = vmatpush2.msra.mxu0 0.0
          %578 = vmatprep.mubr.f32.mxu0 0.0
          %579 = vmatmul.mubr.f32.gmra.mxu0 %v506
          %v580 = vpop.f32.mrf.mxu0
          %v581 = vadd.f32 %v492, %v580
          %v582 = vpop.f32.mrf.mxu0
          %583 = vmatprep.mubr.f32.mxu0 0.0
          %584 = vmatmul.mubr.f32.gmra.mxu0 %v509
          %v585 = vpop.f32.mrf.mxu0
          %v586 = vadd.f32 %v497, %v585
          %v587 = vpop.f32.mrf.mxu0
          %588 = vmatprep.mubr.f32.mxu0 0.0
          %589 = vmatmul.mubr.f32.gmra.mxu0 %v512
          %v590 = vpop.f32.mrf.mxu0
          %v591 = vadd.f32 %v502, %v590
          %v592 = vpop.f32.mrf.mxu0
          %593 = vdwg.mxu0
          %s594 = smul.u32 %s32, 24
          %s595 = scalar_lea.vmem [#allocation6], %s594
          %596 = vst [vmem:[%s595] sm:$0xff] %v581
          %597 = vst [vmem:[%s595 + $0x8] sm:$0xff] %v586
          %598 = vst [vmem:[%s595 + $0x10] sm:$0xff] %v591
        $region98: #{tpu_custom_call.1} parent=81 // pred_fallthru
          _
        %s599 = smul.u32 %s32, 24
        %s600 = scalar_lea.vmem [#allocation6], %s599
        %v601 = vld [vmem:[%s600] sm:$0xff]
        %v602 = vld [vmem:[%s600 + $0x8] sm:$0xff]
        %v603 = vld [vmem:[%s600 + $0x10] sm:$0xff]
        %v604 = vld [vmem:[#allocation2] sm:$0xff]
        %605 = vxpose.xlu0.b32.start [1/16] %v603, 128
        %606 = vxpose.xlu0.b32.cont [2/16] 0.0, 128
        %607 = vxpose.xlu0.b32.cont [3/16] 0.0, 128
        %608 = vxpose.xlu0.b32.cont [4/16] 0.0, 128
        %609 = vxpose.xlu0.b32.cont [5/16] 0.0, 128
        %610 = vxpose.xlu0.b32.cont [6/16] 0.0, 128
        %611 = vxpose.xlu0.b32.cont [7/16] 0.0, 128
        %612 = vxpose.xlu0.b32.cont [8/16] 0.0, 128
        %613 = vxpose.xlu0.b32.cont [9/16] 0.0, 128
        %614 = vxpose.xlu0.b32.cont [10/16] 0.0, 128
        %615 = vxpose.xlu0.b32.cont [11/16] 0.0, 128
        %616 = vxpose.xlu0.b32.cont [12/16] 0.0, 128
        %617 = vxpose.xlu0.b32.cont [13/16] 0.0, 128
        %618 = vxpose.xlu0.b32.cont [14/16] 0.0, 128
        %619 = vxpose.xlu0.b32.cont [15/16] 0.0, 128
        %620 = vxpose.xlu0.b32.end [16/16] 0.0, 128
        %v621 = vpop.trf.xlu0
        %v622 = vpop.trf.xlu0
        %v623 = vpop.trf.xlu0
        %v624 = vpop.trf.xlu0
        %v625 = vpop.trf.xlu0
        %v626 = vpop.trf.xlu0
        %v627 = vpop.trf.xlu0
        %v628 = vpop.trf.xlu0
        %v629 = vpop.trf.xlu0
        %v630 = vpop.trf.xlu0
        %v631 = vpop.trf.xlu0
        %v632 = vpop.trf.xlu0
        %v633 = vpop.trf.xlu0
        %v634 = vpop.trf.xlu0
        %v635 = vpop.trf.xlu0
        %v636 = vpop.trf.xlu0
        %vm637 = vcmask 64512
        %v639 = vsel %vm637, %v621, 0
        %v642 = vsel %vm637, %v622, 0
        %v645 = vsel %vm637, %v623, 0
        %v648 = vsel %vm637, %v624, 0
        %v651 = vsel %vm637, %v625, 0
        %v654 = vsel %vm637, %v626, 0
        %v657 = vsel %vm637, %v627, 0
        %v660 = vsel %vm637, %v628, 0
        %v663 = vsel %vm637, %v629, 0
        %v666 = vsel %vm637, %v630, 0
        %v669 = vsel %vm637, %v631, 0
        %v672 = vsel %vm637, %v632, 0
        %v675 = vsel %vm637, %v633, 0
        %v678 = vsel %vm637, %v634, 0
        %v681 = vsel %vm637, %v635, 0
        %v684 = vsel %vm637, %v636, 0
        %686 = vmatprep.subr.mxu0 0.0
        %687 = vmatpush1.msra.mxu0 0.0
        %688 = vmatprep.subr.mxu0 0.0
        %689 = vmatpush1.msra.mxu0 0.0
        %690 = vmatprep.subr.mxu0 0.0
        %691 = vmatpush1.msra.mxu0 0.0
        %692 = vmatprep.subr.mxu0 0.0
        %693 = vmatpush1.msra.mxu0 0.0
        %694 = vmatprep.subr.mxu0 0.0
        %695 = vmatpush1.msra.mxu0 0.0
        %696 = vmatprep.subr.mxu0 0.0
        %697 = vmatpush1.msra.mxu0 0.0
        %698 = vmatprep.subr.mxu0 0.0
        %699 = vmatpush1.msra.mxu0 0.0
        %700 = vmatprep.subr.mxu0 0.0
        %701 = vmatpush1.msra.mxu0 0.0
        %702 = vmatprep.subr.mxu0 0.0
        %703 = vmatpush1.msra.mxu0 0.0
        %704 = vmatprep.subr.mxu0 0.0
        %705 = vmatpush1.msra.mxu0 0.0
        %706 = vmatprep.subr.mxu0 0.0
        %707 = vmatpush1.msra.mxu0 0.0
        %708 = vmatprep.subr.mxu0 0.0
        %709 = vmatpush1.msra.mxu0 0.0
        %710 = vmatprep.subr.mxu0 0.0
        %711 = vmatpush1.msra.mxu0 0.0
        %712 = vmatprep.subr.mxu0 0.0
        %713 = vmatpush1.msra.mxu0 0.0
        %714 = vmatprep.subr.mxu0 0.0
        %715 = vmatpush1.msra.mxu0 0.0
        %716 = vmatprep.subr.mxu0 0.0
        %717 = vmatpush1.msra.mxu0 %v604
        %718 = vmatprep.subr.mxu0 0.0
        %719 = vmatpush2.msra.mxu0 0.0
        %720 = vmatprep.subr.mxu0 0.0
        %721 = vmatpush2.msra.mxu0 0.0
        %722 = vmatprep.subr.mxu0 0.0
        %723 = vmatpush2.msra.mxu0 0.0
        %724 = vmatprep.subr.mxu0 0.0
        %725 = vmatpush2.msra.mxu0 0.0
        %726 = vmatprep.subr.mxu0 0.0
        %727 = vmatpush2.msra.mxu0 0.0
        %728 = vmatprep.subr.mxu0 0.0
        %729 = vmatpush2.msra.mxu0 0.0
        %730 = vmatprep.subr.mxu0 0.0
        %731 = vmatpush2.msra.mxu0 0.0
        %732 = vmatprep.subr.mxu0 0.0
        %733 = vmatpush2.msra.mxu0 0.0
        %734 = vmatprep.subr.mxu0 0.0
        %735 = vmatpush2.msra.mxu0 0.0
        %736 = vmatprep.subr.mxu0 0.0
        %737 = vmatpush2.msra.mxu0 0.0
        %738 = vmatprep.subr.mxu0 0.0
        %739 = vmatpush2.msra.mxu0 0.0
        %740 = vmatprep.subr.mxu0 0.0
        %741 = vmatpush2.msra.mxu0 0.0
        %742 = vmatprep.subr.mxu0 0.0
        %743 = vmatpush2.msra.mxu0 0.0
        %744 = vmatprep.subr.mxu0 0.0
        %745 = vmatpush2.msra.mxu0 0.0
        %746 = vmatprep.subr.mxu0 0.0
        %747 = vmatpush2.msra.mxu0 0.0
        %748 = vmatprep.subr.mxu0 0.0
        %749 = vmatpush2.msra.mxu0 0.0
        %750 = vmatprep.mubr.f32.mxu0 0.0
        %751 = vmatmul.mubr.f32.gmra.mxu0 %v639
        %v752 = vpop.f32.mrf.mxu0
        %v753 = vadd.f32 0.0, %v752
        %v754 = vpop.f32.mrf.mxu0
        %755 = vmatprep.mubr.f32.mxu0 0.0
        %756 = vmatmul.mubr.f32.gmra.mxu0 %v642
        %v757 = vpop.f32.mrf.mxu0
        %v758 = vadd.f32 0.0, %v757
        %v759 = vpop.f32.mrf.mxu0
        %760 = vmatprep.mubr.f32.mxu0 0.0
        %761 = vmatmul.mubr.f32.gmra.mxu0 %v645
        %v762 = vpop.f32.mrf.mxu0
        %v763 = vadd.f32 0.0, %v762
        %v764 = vpop.f32.mrf.mxu0
        %765 = vmatprep.mubr.f32.mxu0 0.0
        %766 = vmatmul.mubr.f32.gmra.mxu0 %v648
        %v767 = vpop.f32.mrf.mxu0
        %v768 = vadd.f32 0.0, %v767
        %v769 = vpop.f32.mrf.mxu0
        %770 = vmatprep.mubr.f32.mxu0 0.0
        %771 = vmatmul.mubr.f32.gmra.mxu0 %v651
        %v772 = vpop.f32.mrf.mxu0
        %v773 = vadd.f32 0.0, %v772
        %v774 = vpop.f32.mrf.mxu0
        %775 = vmatprep.mubr.f32.mxu0 0.0
        %776 = vmatmul.mubr.f32.gmra.mxu0 %v654
        %v777 = vpop.f32.mrf.mxu0
        %v778 = vadd.f32 0.0, %v777
        %v779 = vpop.f32.mrf.mxu0
        %780 = vmatprep.mubr.f32.mxu0 0.0
        %781 = vmatmul.mubr.f32.gmra.mxu0 %v657
        %v782 = vpop.f32.mrf.mxu0
        %v783 = vadd.f32 0.0, %v782
        %v784 = vpop.f32.mrf.mxu0
        %785 = vmatprep.mubr.f32.mxu0 0.0
        %786 = vmatmul.mubr.f32.gmra.mxu0 %v660
        %v787 = vpop.f32.mrf.mxu0
        %v788 = vadd.f32 0.0, %v787
        %v789 = vpop.f32.mrf.mxu0
        %790 = vmatprep.mubr.f32.mxu0 0.0
        %791 = vmatmul.mubr.f32.gmra.mxu0 %v663
        %v792 = vpop.f32.mrf.mxu0
        %v793 = vadd.f32 0.0, %v792
        %v794 = vpop.f32.mrf.mxu0
        %795 = vmatprep.mubr.f32.mxu0 0.0
        %796 = vmatmul.mubr.f32.gmra.mxu0 %v666
        %v797 = vpop.f32.mrf.mxu0
        %v798 = vadd.f32 0.0, %v797
        %v799 = vpop.f32.mrf.mxu0
        %800 = vmatprep.mubr.f32.mxu0 0.0
        %801 = vmatmul.mubr.f32.gmra.mxu0 %v669
        %v802 = vpop.f32.mrf.mxu0
        %v803 = vadd.f32 0.0, %v802
        %v804 = vpop.f32.mrf.mxu0
        %805 = vmatprep.mubr.f32.mxu0 0.0
        %806 = vmatmul.mubr.f32.gmra.mxu0 %v672
        %v807 = vpop.f32.mrf.mxu0
        %v808 = vadd.f32 0.0, %v807
        %v809 = vpop.f32.mrf.mxu0
        %810 = vmatprep.mubr.f32.mxu0 0.0
        %811 = vmatmul.mubr.f32.gmra.mxu0 %v675
        %v812 = vpop.f32.mrf.mxu0
        %v813 = vadd.f32 0.0, %v812
        %v814 = vpop.f32.mrf.mxu0
        %815 = vmatprep.mubr.f32.mxu0 0.0
        %816 = vmatmul.mubr.f32.gmra.mxu0 %v678
        %v817 = vpop.f32.mrf.mxu0
        %v818 = vadd.f32 0.0, %v817
        %v819 = vpop.f32.mrf.mxu0
        %820 = vmatprep.mubr.f32.mxu0 0.0
        %821 = vmatmul.mubr.f32.gmra.mxu0 %v681
        %v822 = vpop.f32.mrf.mxu0
        %v823 = vadd.f32 0.0, %v822
        %v824 = vpop.f32.mrf.mxu0
        %825 = vmatprep.mubr.f32.mxu0 0.0
        %826 = vmatmul.mubr.f32.gmra.mxu0 %v684
        %v827 = vpop.f32.mrf.mxu0
        %v828 = vadd.f32 0.0, %v827
        %v829 = vpop.f32.mrf.mxu0
        %830 = vdwg.mxu0
        %v831 = vld [vmem:[#allocation3] sm:$0x1]
        %v832 = vmax.f32 %v753, %v773
        %v833 = vmax.f32 %v758, %v778
        %v834 = vmax.f32 %v763, %v783
        %v835 = vmax.f32 %v768, %v788
        %v836 = vmax.f32 %v832, %v793
        %v837 = vmax.f32 %v833, %v798
        %v838 = vmax.f32 %v834, %v803
        %v839 = vmax.f32 %v835, %v808
        %v840 = vmax.f32 %v836, %v813
        %v841 = vmax.f32 %v837, %v818
        %v842 = vmax.f32 %v838, %v823
        %v843 = vmax.f32 %v839, %v828
        %v844 = vmax.f32 %v840, %v841
        %v845 = vmax.f32 %v842, %v843
        %v846 = vmax.f32 %v844, %v845
        %v847 = vrot.slane %v846, 4
        %v848 = vmax.f32 %v846, %v847
        %v849 = vrot.slane %v848, 2
        %v850 = vmax.f32 %v848, %v849
        %v851 = vrot.slane %v850, 1
        %v852 = vmax.f32 %v850, %v851
        %v853 = vmax.f32 %v831, %v852
        %v854 = vsub.f32 %v831, %v853
        %v855 = vmul.f32 %v854, 1.442695
        %v856 = vpow.pop %v855
        %v858 = vlaneseq
        %v859 = vshrl.u32 %v858, 7
        %v860 = vsub.s32 0, %v859
        %v861 = vrot.slane %v853, %v860
        %v863 = vsub.f32 %v753, %v861
        %v864 = vsub.f32 %v758, %v861
        %v865 = vsub.f32 %v763, %v861
        %v866 = vsub.f32 %v768, %v861
        %v867 = vsub.f32 %v773, %v861
        %v868 = vsub.f32 %v778, %v861
        %v869 = vsub.f32 %v783, %v861
        %v870 = vsub.f32 %v788, %v861
        %v871 = vsub.f32 %v793, %v861
        %v872 = vsub.f32 %v798, %v861
        %v873 = vsub.f32 %v803, %v861
        %v874 = vsub.f32 %v808, %v861
        %v875 = vsub.f32 %v813, %v861
        %v876 = vsub.f32 %v818, %v861
        %v877 = vsub.f32 %v823, %v861
        %v878 = vsub.f32 %v828, %v861
        %v879 = vmul.f32 %v863, 1.442695
        %v880 = vpow.pop %v879
        %v881 = vmul.f32 %v864, 1.442695
        %v882 = vpow.pop %v881
        %v883 = vmul.f32 %v865, 1.442695
        %v884 = vpow.pop %v883
        %v885 = vmul.f32 %v866, 1.442695
        %v886 = vpow.pop %v885
        %v887 = vmul.f32 %v867, 1.442695
        %v888 = vpow.pop %v887
        %v889 = vmul.f32 %v868, 1.442695
        %v890 = vpow.pop %v889
        %v891 = vmul.f32 %v869, 1.442695
        %v892 = vpow.pop %v891
        %v893 = vmul.f32 %v870, 1.442695
        %v894 = vpow.pop %v893
        %v895 = vmul.f32 %v871, 1.442695
        %v896 = vpow.pop %v895
        %v897 = vmul.f32 %v872, 1.442695
        %v898 = vpow.pop %v897
        %v899 = vmul.f32 %v873, 1.442695
        %v900 = vpow.pop %v899
        %v901 = vmul.f32 %v874, 1.442695
        %v902 = vpow.pop %v901
        %v903 = vmul.f32 %v875, 1.442695
        %v904 = vpow.pop %v903
        %v905 = vmul.f32 %v876, 1.442695
        %v906 = vpow.pop %v905
        %v907 = vmul.f32 %v877, 1.442695
        %v908 = vpow.pop %v907
        %v909 = vmul.f32 %v878, 1.442695
        %v910 = vpow.pop %v909
        %v911 = vld [vmem:[#allocation4] sm:$0x1]
        %v912 = vmul.f32 %v856, %v911
        %v913 = vadd.f32 %v880, %v882
        %v914 = vadd.f32 %v913, %v884
        %v915 = vadd.f32 %v914, %v886
        %v916 = vadd.f32 %v915, %v888
        %v917 = vadd.f32 %v916, %v890
        %v918 = vadd.f32 %v917, %v892
        %v919 = vadd.f32 %v918, %v894
        %v920 = vadd.f32 %v919, %v896
        %v921 = vadd.f32 %v920, %v898
        %v922 = vadd.f32 %v921, %v900
        %v923 = vadd.f32 %v922, %v902
        %v924 = vadd.f32 %v923, %v904
        %v925 = vadd.f32 %v924, %v906
        %v926 = vadd.f32 %v925, %v908
        %v927 = vadd.f32 %v926, %v910
        %v928 = vrot.slane %v927, 4
        %v929 = vadd.f32 %v927, %v928
        %v930 = vrot.slane %v929, 2
        %v931 = vadd.f32 %v929, %v930
        %v932 = vrot.slane %v931, 1
        %v933 = vadd.f32 %v931, %v932
        %v934 = vadd.f32 %v912, %v933
        %935 = vst [vmem:[#allocation4] sm:$0x1] %v934
        %v936 = vld [vmem:[#allocation5] sm:$0xff]
        %v937 = vld [vmem:[#allocation5 + $0x8] sm:$0xff]
        %v939 = vlaneseq
        %v940 = vshrl.u32 %v939, 7
        %v941 = vsub.s32 0, %v940
        %v942 = vrot.slane %v856, %v941
        %v944 = vmul.f32 %v942, %v936
        %v945 = vmul.f32 %v942, %v937
        %946 = vmatprep.subr.mxu0 0.0
        %947 = vmatpush1.msra.mxu0 %v910
        %948 = vmatprep.subr.mxu0 0.0
        %949 = vmatpush1.msra.mxu0 %v908
        %950 = vmatprep.subr.mxu0 0.0
        %951 = vmatpush1.msra.mxu0 %v906
        %952 = vmatprep.subr.mxu0 0.0
        %953 = vmatpush1.msra.mxu0 %v904
        %954 = vmatprep.subr.mxu0 0.0
        %955 = vmatpush1.msra.mxu0 %v902
        %956 = vmatprep.subr.mxu0 0.0
        %957 = vmatpush1.msra.mxu0 %v900
        %958 = vmatprep.subr.mxu0 0.0
        %959 = vmatpush1.msra.mxu0 %v898
        %960 = vmatprep.subr.mxu0 0.0
        %961 = vmatpush1.msra.mxu0 %v896
        %962 = vmatprep.subr.mxu0 0.0
        %963 = vmatpush1.msra.mxu0 %v894
        %964 = vmatprep.subr.mxu0 0.0
        %965 = vmatpush1.msra.mxu0 %v892
        %966 = vmatprep.subr.mxu0 0.0
        %967 = vmatpush1.msra.mxu0 %v890
        %968 = vmatprep.subr.mxu0 0.0
        %969 = vmatpush1.msra.mxu0 %v888
        %970 = vmatprep.subr.mxu0 0.0
        %971 = vmatpush1.msra.mxu0 %v886
        %972 = vmatprep.subr.mxu0 0.0
        %973 = vmatpush1.msra.mxu0 %v884
        %974 = vmatprep.subr.mxu0 0.0
        %975 = vmatpush1.msra.mxu0 %v882
        %976 = vmatprep.subr.mxu0 0.0
        %977 = vmatpush1.msra.mxu0 %v880
        %978 = vmatprep.subr.mxu0 0.0
        %979 = vmatpush2.msra.mxu0 0.0
        %980 = vmatprep.subr.mxu0 0.0
        %981 = vmatpush2.msra.mxu0 0.0
        %982 = vmatprep.subr.mxu0 0.0
        %983 = vmatpush2.msra.mxu0 0.0
        %984 = vmatprep.subr.mxu0 0.0
        %985 = vmatpush2.msra.mxu0 0.0
        %986 = vmatprep.subr.mxu0 0.0
        %987 = vmatpush2.msra.mxu0 0.0
        %988 = vmatprep.subr.mxu0 0.0
        %989 = vmatpush2.msra.mxu0 0.0
        %990 = vmatprep.subr.mxu0 0.0
        %991 = vmatpush2.msra.mxu0 0.0
        %992 = vmatprep.subr.mxu0 0.0
        %993 = vmatpush2.msra.mxu0 0.0
        %994 = vmatprep.subr.mxu0 0.0
        %995 = vmatpush2.msra.mxu0 0.0
        %996 = vmatprep.subr.mxu0 0.0
        %997 = vmatpush2.msra.mxu0 0.0
        %998 = vmatprep.subr.mxu0 0.0
        %999 = vmatpush2.msra.mxu0 0.0
        %1000 = vmatprep.subr.mxu0 0.0
        %1001 = vmatpush2.msra.mxu0 0.0
        %1002 = vmatprep.subr.mxu0 0.0
        %1003 = vmatpush2.msra.mxu0 0.0
        %1004 = vmatprep.subr.mxu0 0.0
        %1005 = vmatpush2.msra.mxu0 0.0
        %1006 = vmatprep.subr.mxu0 0.0
        %1007 = vmatpush2.msra.mxu0 0.0
        %1008 = vmatprep.subr.mxu0 0.0
        %1009 = vmatpush2.msra.mxu0 0.0
        %1010 = vmatprep.mubr.f32.mxu0 0.0
        %1011 = vmatmul.mubr.f32.gmra.mxu0 %v601
        %v1012 = vpop.f32.mrf.mxu0
        %v1013 = vadd.f32 0.0, %v1012
        %v1014 = vpop.f32.mrf.mxu0
        %1015 = vmatprep.mubr.f32.mxu0 0.0
        %1016 = vmatmul.mubr.f32.gmra.mxu0 %v602
        %v1017 = vpop.f32.mrf.mxu0
        %v1018 = vadd.f32 0.0, %v1017
        %v1019 = vpop.f32.mrf.mxu0
        %1020 = vdwg.mxu0
        %v1021 = vadd.f32 %v944, %v1013
        %v1022 = vadd.f32 %v945, %v1018
        %1023 = vst [vmem:[#allocation5] sm:$0xff] %v1021
        %1024 = vst [vmem:[#allocation5 + $0x8] sm:$0xff] %v1022
        %1025 = vst [vmem:[#allocation3] sm:$0x1] %v853
        %p1026 = scmp.eq.s32.totalorder %s32, 1
        // Predicated region
        $region99: #{tpu_custom_call.1} parent=81 // pred_check
          %p1027 = pneg %p1026
        $region100: #{tpu_custom_call.1} parent=81 // pred_check_branch
          %1029 = sbr.rel (%p1027) target = $region102
        $region101: #{tpu_custom_call.1} parent=81 // pred_region
          %v1030 = vld [vmem:[#allocation4] sm:$0x1]
          %v1031 = vrcp.pop %v1030
          %v1032 = vmul.f32 %v1030, %v1031
          %v1033 = vsub.f32 2.0, %v1032
          %v1034 = vmul.f32 %v1031, %v1033
          %s1035 = sld [smem:[#allocation7]]
          %v1036 = vld [vmem:[#allocation5] sm:$0xff]
          %v1037 = vld [vmem:[#allocation5 + $0x8] sm:$0xff]
          %v1039 = vlaneseq
          %v1040 = vshrl.u32 %v1039, 7
          %v1041 = vsub.s32 0, %v1040
          %v1042 = vrot.slane %v1034, %v1041
          %v1044 = vmul.f32 %v1036, %v1042
          %v1045 = vmul.f32 %v1037, %v1042
          %v1046 = vstv %s1035
          %v1047 = vmul.f32 %v1046, %v1044
          %v1048 = vmul.f32 %v1046, %v1045
          %v1049 = vadd.f32 %v1047, %v385
          %v1050 = vadd.f32 %v1048, %v386
          %1051 = vst [vmem:[%s384] sm:$0xff] %v1049
          %1052 = vst [vmem:[%s384 + $0x8] sm:$0xff] %v1050
        $region102: #{tpu_custom_call.1} parent=81 // pred_fallthru
          _
        %s1053 = sand.u32 %s215, 1
        %s1054 = scalar_lea.sflag [#allocation11], %s1053
        %s1055 = sand.u32 %s215, 1
        %s1056 = smul.addr %s1055, 16
        %s1057 = scalar_lea.vmem [#allocation12], %s1056
        // Predicated region
        $region103: #{tpu_custom_call.1} parent=81 // pred_check
          %p1058 = pneg %p225
        $region104: #{tpu_custom_call.1} parent=81 // pred_check_branch
          %1060 = sbr.rel (%p1058) target = $region106
        $region105: #{tpu_custom_call.1} parent=81 // pred_region
          %s1062 = ssub.s32 256, 256
          %1063 = vsyncadd %s1054, %s1062
          %s1064 = smul.addr %s30, 4
          %s1065 = sadd.s32 %s31, %s1064
          %s1066 = smul.addr %s1065, 128
          %s1067 = scalar_lea.hbm %s7, %s1066
          %s1068 = sshll.u32 %s1057, 4
          %s1069 = int_to_ptr.vmem [resolvable:$true] %s1068
          %1074 = dma.vmem_to_hbm [thread:$0]  %s1069, 256, %s1067, %s1054, 128, 256, 8
        $region106: #{tpu_custom_call.1} parent=81 // pred_fallthru
          _
      $region82: #{tpu_custom_call.1} parent=5 // pred_fallthru
        _
      %p1075 = scmp.le.s32.totalorder 2, %s20
      // Predicated region
      $region107: #{tpu_custom_call.1} parent=5 // pred_check
        %p1076 = pneg %p1075
      $region108: #{tpu_custom_call.1} parent=5 // pred_check_branch
        %1078 = sbr.rel (%p1076) target = $region110
      $region109: #{tpu_custom_call.1} parent=5 // pred_region
        %s1079 = ssub.s32 %s20, 2
        // Predicated region
        $region111: #{tpu_custom_call.1} parent=109 // pred_check
          %p1080 = pneg %p231
        $region112: #{tpu_custom_call.1} parent=109 // pred_check_branch
          %1082 = sbr.rel (%p1080) target = $region114
        $region113: #{tpu_custom_call.1} parent=109 // pred_region
          %s1083 = sand.u32 %s216, 1
          %s1084 = scalar_lea.sflag [#allocation11], %s1083
          %s1085 = sand.u32 %s216, 1
          %s1086 = smul.addr %s1085, 16
          %s1087 = scalar_lea.vmem [#allocation12], %s1086
          %1088 = dma.done %s1084, 256
        $region114: #{tpu_custom_call.1} parent=109 // pred_fallthru
          _
      $region110: #{tpu_custom_call.1} parent=5 // pred_fallthru
        _
    $region6: #{tpu_custom_call.1} parent=1 // loop_footer
      %s24 = sadd.s32 1, %s20
    $region7: #{tpu_custom_call.1} parent=1 // loop_footer_branch
      %19 = sbr.rel target = $region3
    $region8: #{tpu_custom_call.1} parent=1 // loop_exit
      _
    %1089 = vsyncpa [#allocation10], 1
    %s1090 = scalar_lea.sflag [#allocation10], 1
    %1091 = vsyncpa %s1090, 1
    %1092 = vsyncpa [#allocation11], 1
    %s1093 = scalar_lea.sflag [#allocation11], 1
    %1094 = vsyncpa %s1093, 1

</llo_original>
